<compile_context>
chip_gen: v6e
topology: v6e:2x2x1
jax: 0.10.0
libtpu: 0.0.40
codegen_flags: <defaults>
</compile_context>

<pallas_src>
import functools

import jax
import jax.numpy as jnp
from jax.experimental import pallas as pl
from jax.experimental.pallas import tpu as pltpu

BN_EPS = 1e-5


def _classifier_kernel(x_ref, scale_ref, shift_ref, w_ref, b_ref, o_ref,
                       acc_ref, *, inv_hw):
    # x_ref:     (tN, C, tHW)  activation tile (NCHW consumed as N, C, HW)
    # scale_ref: (C, 1)        gamma / sqrt(var + eps)
    # shift_ref: (C, 1)        beta - mean * scale
    # w_ref:     (C, K)        linear weight (transposed vs torch layout)
    # b_ref:     (1, K)        linear bias
    # o_ref:     (tN, K)       log-probabilities (written on the last HW step)
    # acc_ref:   (tN, C) f32   pooled-sum accumulator (VMEM scratch)
    hw_step = pl.program_id(1)

    @pl.when(hw_step == 0)
    def _():
        acc_ref[...] = jnp.zeros_like(acc_ref)

    # BatchNorm (eval) + ReLU on the VPU; reduce over the HW lane axis and
    # accumulate a raw sum (mean is applied once in the finalize step).
    x = x_ref[...].astype(jnp.float32)                       # (tN, C, tHW)
    xn = x * scale_ref[...][None, :, :] + shift_ref[...][None, :, :]
    xn = jnp.maximum(xn, 0.0)
    acc_ref[...] += jnp.sum(xn, axis=-1)                     # (tN, C)

    @pl.when(hw_step == pl.num_programs(1) - 1)
    def _():
        pooled = acc_ref[...] * inv_hw                       # mean over H*W
        logits = jnp.dot(pooled, w_ref[...],
                         preferred_element_type=jnp.float32) + b_ref[...]
        m = jnp.max(logits, axis=-1, keepdims=True)
        z = logits - m
        lse = jnp.log(jnp.sum(jnp.exp(z), axis=-1, keepdims=True))
        o_ref[...] = (z - lse).astype(o_ref.dtype)


def _pick_n_tile(n):
    # Output block is (tN, K): tN must be a multiple of 8 or equal to N.
    for t in (8, 16):
        if n % t == 0:
            return t
    return n


def _pick_hw_tile(hw, tn, c, itemsize, max_tile_bytes=6 * 1024 * 1024):
    # Per-buffer x-tile budget (the pipeline double-buffers each input); keep
    # well under the 32 MiB default scoped VMEM and v7x's 64 MiB physical VMEM.
    if tn * c * hw * itemsize <= max_tile_bytes:
        return hw                                    # full HW fits in one tile
    budget_lanes = max(128, max_tile_bytes // (tn * c * itemsize))
    t = (budget_lanes // 128) * 128
    while t >= 128:
        if hw % t == 0:          # must divide HW exactly (no padded tail rows)
            return t
        t -= 128
    return hw                    # fallback: no clean divisor; take full HW


def linear_classifier_forward(x_nchw, params):
    """x_nchw: (N, C, H, W). Returns (N, num_classes) float32 log-probs."""
    gamma, beta, run_mean, run_var, w, b = (
        params["gamma"], params["beta"], params["running_mean"],
        params["running_var"], params["weight"], params["bias"])

    n, c, h, w_sp = x_nchw.shape
    hw = h * w_sp
    k = b.shape[0]

    # Fold BN (eval) parameters into per-channel scale/shift (tiny, plain JAX).
    inv_std = jax.lax.rsqrt(run_var.astype(jnp.float32) + BN_EPS)
    scale = (gamma * inv_std).reshape(c, 1).astype(jnp.float32)
    shift = (beta - run_mean * gamma * inv_std).reshape(c, 1).astype(jnp.float32)

    # Free reshape of contiguous dims: NCHW -> (N, C, H*W). No HBM transpose.
    x = x_nchw.reshape(n, c, hw)

    w_t = w.T.astype(jnp.float32)              # (C, K); torch stores (K, C)
    b2 = b.reshape(1, k).astype(jnp.float32)

    tn = _pick_n_tile(n)
    thw = _pick_hw_tile(hw, tn, c, jnp.dtype(x.dtype).itemsize)
    grid = (n // tn, hw // thw)                # HW reduction axis last

    kernel = functools.partial(_classifier_kernel, inv_hw=1.0 / float(hw))

    out = pl.pallas_call(
        kernel,
        out_shape=jax.ShapeDtypeStruct((n, k), jnp.float32),
        grid_spec=pltpu.PrefetchScalarGridSpec(
            num_scalar_prefetch=0,
            grid=grid,
            in_specs=[
                pl.BlockSpec((tn, c, thw), lambda i, j: (i, 0, j)),
                pl.BlockSpec((c, 1), lambda i, j: (0, 0)),
                pl.BlockSpec((c, 1), lambda i, j: (0, 0)),
                pl.BlockSpec((c, k), lambda i, j: (0, 0)),
                pl.BlockSpec((1, k), lambda i, j: (0, 0)),
            ],
            # Same output block across the HW axis -> resident accumulator target.
            out_specs=pl.BlockSpec((tn, k), lambda i, j: (i, 0)),
            scratch_shapes=[pltpu.VMEM((tn, c), jnp.float32)],
        ),
        compiler_params=pltpu.CompilerParams(
            dimension_semantics=("parallel", "arbitrary"),
            vmem_limit_bytes=64 * 1024 * 1024,
        ),
    )(x, scale, shift, w_t, b2)
    return out


def init_params(key, in_channels, num_classes):
    k1, k2, k3, k4 = jax.random.split(key, 4)
    return {
        "gamma": jax.random.uniform(k1, (in_channels,), jnp.float32, 0.5, 1.5),
        "beta": jax.random.normal(k2, (in_channels,), jnp.float32) * 0.1,
        "running_mean": jax.random.normal(k3, (in_channels,), jnp.float32) * 0.1,
        "running_var": jnp.ones((in_channels,), jnp.float32),
        # nn.Linear default init: U(-1/sqrt(C), 1/sqrt(C))
        "weight": jax.random.uniform(
            k4, (num_classes, in_channels), jnp.float32,
            -1.0 / jnp.sqrt(in_channels), 1.0 / jnp.sqrt(in_channels)),
        "bias": jnp.zeros((num_classes,), jnp.float32),
    }


def _reference(x_nchw, params):
    """Pure-JAX reference (eval-mode BN -> ReLU -> GAP -> Linear -> log_softmax)."""
    inv_std = jax.lax.rsqrt(params["running_var"] + BN_EPS)
    scale = params["gamma"] * inv_std
    shift = params["beta"] - params["running_mean"] * scale
    xn = x_nchw * scale[None, :, None, None] + shift[None, :, None, None]
    xn = jnp.maximum(xn, 0.0)
    pooled = jnp.mean(xn, axis=(2, 3))
    logits = pooled @ params["weight"].T + params["bias"]
    return jax.nn.log_softmax(logits, axis=-1)


if __name__ == "__main__":
    key = jax.random.PRNGKey(0)
    kx, kp = jax.random.split(key)

    N, C, H, W = 2, 4, 16, 16
    NUM_CLASSES = 10

    x = jax.random.normal(kx, (N, C, H, W), jnp.float32)
    params = init_params(kp, C, NUM_CLASSES)

    out = linear_classifier_forward(x, params)
    out = jax.block_until_ready(out)

    ref = _reference(x, params)

    # Sanity: shape, log_softmax rows exponentiate-sum to 1, matches reference.
    row_sums = jnp.sum(jnp.exp(out), axis=-1)
    assert out.shape == (N, NUM_CLASSES)
    assert bool(jnp.all(jnp.abs(row_sums - 1.0) < 1e-4))
    assert bool(jnp.all(jnp.abs(out - ref) < 1e-4))

    print("KERNEL_OK")
</pallas_src>

<mosaic_0001>
module attributes {stable_mosaic.version = 11 : i64} {
  func.func @_classifier_kernel(%arg0: i32, %arg1: i32, %arg2: memref<2x4x256xf32, #tpu.memory_space<vmem>>, %arg3: memref<4x1xf32, #tpu.memory_space<vmem>>, %arg4: memref<4x1xf32, #tpu.memory_space<vmem>>, %arg5: memref<4x10xf32, #tpu.memory_space<vmem>>, %arg6: memref<1x10xf32, #tpu.memory_space<vmem>>, %arg7: memref<2x10xf32, #tpu.memory_space<vmem>>, %arg8: memref<2x4xf32, #tpu.memory_space<vmem>>) attributes {dimension_semantics = [#tpu.dimension_semantics<parallel>, #tpu.dimension_semantics<arbitrary>], iteration_bounds = array<i64: 1, 1>, scalar_prefetch = 0 : i64, scratch_operands = 1 : i64, tpu.core_type = #tpu.core_type<tc>, window_params = [{transform_indices = @transform_0, window_bounds = array<i64: 2, 4, 256>}, {pipeline_mode = #tpu.pipeline_mode<synchronous>, transform_indices = @transform_1, window_bounds = array<i64: 4, 1>}, {pipeline_mode = #tpu.pipeline_mode<synchronous>, transform_indices = @transform_2, window_bounds = array<i64: 4, 1>}, {pipeline_mode = #tpu.pipeline_mode<synchronous>, transform_indices = @transform_3, window_bounds = array<i64: 4, 10>}, {pipeline_mode = #tpu.pipeline_mode<synchronous>, transform_indices = @transform_4, window_bounds = array<i64: 1, 10>}, {transform_indices = @transform_5, window_bounds = array<i64: 2, 10>}]} {
    %c0_i32 = arith.constant 0 : i32
    %0 = arith.cmpi eq, %arg1, %c0_i32 : i32
    %1 = arith.extui %0 : i1 to i32
    %c0_i32_0 = arith.constant 0 : i32
    %2 = arith.cmpi ne, %1, %c0_i32_0 : i32
    scf.if %2 {
      %cst_14 = arith.constant 0.000000e+00 : f32
      %21 = vector.broadcast %cst_14 : f32 to vector<2x4xf32>
      %c0_15 = arith.constant 0 : index
      %c0_16 = arith.constant 0 : index
      %22 = vector.load %arg8[%c0_15, %c0_16] : memref<2x4xf32, #tpu.memory_space<vmem>>, vector<2x4xf32>
      tpu.vector_store %arg8[%c0_15, %c0_16], %21 {strides = array<i32>} : memref<2x4xf32, #tpu.memory_space<vmem>>, vector<2x4xf32>,
    } else {
    }
    %c0 = arith.constant 0 : index
    %c0_1 = arith.constant 0 : index
    %c0_2 = arith.constant 0 : index
    %3 = vector.load %arg2[%c0, %c0_1, %c0_2] : memref<2x4x256xf32, #tpu.memory_space<vmem>>, vector<2x4x256xf32>
    %c0_3 = arith.constant 0 : index
    %c0_4 = arith.constant 0 : index
    %4 = vector.load %arg3[%c0_3, %c0_4] : memref<4x1xf32, #tpu.memory_space<vmem>>, vector<4x1xf32>
    %5 = vector.shape_cast %4 : vector<4x1xf32> to vector<1x4x1xf32>
    %6 = vector.broadcast %5 : vector<1x4x1xf32> to vector<2x4x256xf32>
    %7 = arith.mulf %3, %6 : vector<2x4x256xf32>
    %c0_5 = arith.constant 0 : index
    %c0_6 = arith.constant 0 : index
    %8 = vector.load %arg4[%c0_5, %c0_6] : memref<4x1xf32, #tpu.memory_space<vmem>>, vector<4x1xf32>
    %9 = vector.shape_cast %8 : vector<4x1xf32> to vector<1x4x1xf32>
    %10 = vector.broadcast %9 : vector<1x4x1xf32> to vector<2x4x256xf32>
    %11 = arith.addf %7, %10 : vector<2x4x256xf32>
    %cst = arith.constant 0.000000e+00 : f32
    %12 = vector.broadcast %cst : f32 to vector<2x4x256xf32>
    %13 = arith.maximumf %11, %12 : vector<2x4x256xf32>
    %c0_7 = arith.constant 0 : index
    %c0_8 = arith.constant 0 : index
    %14 = vector.load %arg8[%c0_7, %c0_8] : memref<2x4xf32, #tpu.memory_space<vmem>>, vector<2x4xf32>
    %cst_9 = arith.constant dense<0.000000e+00> : vector<2x4xf32>
    %15 = vector.multi_reduction <add>, %13, %cst_9 [2] : vector<2x4x256xf32> to vector<2x4xf32>
    %16 = arith.addf %14, %15 : vector<2x4xf32>
    %c0_10 = arith.constant 0 : index
    %c0_11 = arith.constant 0 : index
    %17 = vector.load %arg8[%c0_10, %c0_11] : memref<2x4xf32, #tpu.memory_space<vmem>>, vector<2x4xf32>
    tpu.vector_store %arg8[%c0_10, %c0_11], %16 {strides = array<i32>} : memref<2x4xf32, #tpu.memory_space<vmem>>, vector<2x4xf32>,
    %c0_i32_12 = arith.constant 0 : i32
    %18 = arith.cmpi eq, %arg1, %c0_i32_12 : i32
    %19 = arith.extui %18 : i1 to i32
    %c0_i32_13 = arith.constant 0 : i32
    %20 = arith.cmpi ne, %19, %c0_i32_13 : i32
    scf.if %20 {
      %c0_14 = arith.constant 0 : index
      %c0_15 = arith.constant 0 : index
      %21 = vector.load %arg8[%c0_14, %c0_15] : memref<2x4xf32, #tpu.memory_space<vmem>>, vector<2x4xf32>
      %cst_16 = arith.constant 3.906250e-03 : f32
      %22 = vector.broadcast %cst_16 : f32 to vector<2x4xf32>
      %23 = arith.mulf %21, %22 : vector<2x4xf32>
      %c0_17 = arith.constant 0 : index
      %c0_18 = arith.constant 0 : index
      %24 = vector.load %arg5[%c0_17, %c0_18] : memref<4x10xf32, #tpu.memory_space<vmem>>, vector<4x10xf32>
      %cst_19 = arith.constant dense<0.000000e+00> : vector<2x10xf32>
      %25 = tpu.matmul %23, %24, %cst_19 {dimension_numbers = #tpu.dot_dimension_numbers<[1], [0], [0], [1], [0, 0, 1, 1], [], []>} : vector<2x4xf32>, vector<4x10xf32>, vector<2x10xf32> -> vector<2x10xf32>
      %c0_20 = arith.constant 0 : index
      %c0_21 = arith.constant 0 : index
      %26 = vector.load %arg6[%c0_20, %c0_21] : memref<1x10xf32, #tpu.memory_space<vmem>>, vector<1x10xf32>
      %27 = vector.broadcast %26 : vector<1x10xf32> to vector<2x10xf32>
      %28 = arith.addf %25, %27 : vector<2x10xf32>
      %cst_22 = arith.constant dense<0xFF800000> : vector<2xf32>
      %29 = vector.multi_reduction <maximumf>, %28, %cst_22 [1] : vector<2x10xf32> to vector<2xf32>
      %30 = vector.shape_cast %29 : vector<2xf32> to vector<2x1xf32>
      %31 = vector.broadcast %30 : vector<2x1xf32> to vector<2x10xf32>
      %32 = arith.subf %28, %31 : vector<2x10xf32>
      %33 = math.exp %32 : vector<2x10xf32>
      %cst_23 = arith.constant dense<0.000000e+00> : vector<2xf32>
      %34 = vector.multi_reduction <add>, %33, %cst_23 [1] : vector<2x10xf32> to vector<2xf32>
      %35 = vector.shape_cast %34 : vector<2xf32> to vector<2x1xf32>
      %36 = math.log %35 : vector<2x1xf32>
      %37 = vector.broadcast %36 : vector<2x1xf32> to vector<2x10xf32>
      %38 = arith.subf %32, %37 : vector<2x10xf32>
      %c0_24 = arith.constant 0 : index
      %c0_25 = arith.constant 0 : index
      %39 = vector.load %arg7[%c0_24, %c0_25] : memref<2x10xf32, #tpu.memory_space<vmem>>, vector<2x10xf32>
      tpu.vector_store %arg7[%c0_24, %c0_25], %38 {strides = array<i32>} : memref<2x10xf32, #tpu.memory_space<vmem>>, vector<2x10xf32>,
    } else {
    }
    return
  }
  func.func @transform_0(%arg0: i32, %arg1: i32) -> (i32, i32, i32) {
    %c0_i32 = arith.constant 0 : i32
    %c0_i32_0 = arith.constant 0 : i32
    return %arg0, %c0_i32, %arg1 : i32, i32, i32
  }
  func.func @transform_1(%arg0: i32, %arg1: i32) -> (i32, i32) {
    %c0_i32 = arith.constant 0 : i32
    %c0_i32_0 = arith.constant 0 : i32
    %c0_i32_1 = arith.constant 0 : i32
    return %c0_i32, %c0_i32_0 : i32, i32
  }
  func.func @transform_2(%arg0: i32, %arg1: i32) -> (i32, i32) {
    %c0_i32 = arith.constant 0 : i32
    %c0_i32_0 = arith.constant 0 : i32
    %c0_i32_1 = arith.constant 0 : i32
    return %c0_i32, %c0_i32_0 : i32, i32
  }
  func.func @transform_3(%arg0: i32, %arg1: i32) -> (i32, i32) {
    %c0_i32 = arith.constant 0 : i32
    %c0_i32_0 = arith.constant 0 : i32
    %c0_i32_1 = arith.constant 0 : i32
    return %c0_i32, %c0_i32_0 : i32, i32
  }
  func.func @transform_4(%arg0: i32, %arg1: i32) -> (i32, i32) {
    %c0_i32 = arith.constant 0 : i32
    %c0_i32_0 = arith.constant 0 : i32
    %c0_i32_1 = arith.constant 0 : i32
    return %c0_i32, %c0_i32_0 : i32, i32
  }
  func.func @transform_5(%arg0: i32, %arg1: i32) -> (i32, i32) {
    %c0_i32 = arith.constant 0 : i32
    %c0_i32_0 = arith.constant 0 : i32
    return %arg0, %c0_i32 : i32, i32
  }
}

</mosaic_0001>

<llo_original>
// kernel: tpu_custom_call.1
$region0: #{tpu_custom_call.1}
  #allocation0 [shape = 'u32[]', space=smem, size = 0x4, offset = 0x4, fixed_abs, tag = 'smem constant byte address 0x4 - core index']
  #allocation1 [shape = 'u32[144,128]{1,0:T(1,128)}', space=vmem, size = 0x12000, scoped, tag = 'internal scratch']
  #allocation2 [shape = 'f32[2,4]{1,0:T(2,128)}', space=vmem, size = 0x400, scoped, tag = 'scratch operand']
  %s0 = inlined_call_operand.hbm [shape: f32[2,4,256], index: 0, kind: input, shape index: {}]
  %s1 = inlined_call_operand.vmem [shape: f32[4,1], index: 1, kind: input, shape index: {}]
  %s2 = inlined_call_operand.vmem [shape: f32[4,1], index: 2, kind: input, shape index: {}]
  %s3 = inlined_call_operand.vmem [shape: f32[4,10], index: 3, kind: input, shape index: {}]
  %s4 = inlined_call_operand.vmem [shape: f32[1,10], index: 4, kind: input, shape index: {}]
  %s5 = inlined_call_operand.hbm [shape: f32[2,10], index: 5, kind: output, shape index: {}]
  %s6 = sld [smem:[#allocation0]]
  $region42: #{tpu_custom_call.1} parent=0
    _
  %s8 = ssub.s32 1, %s6
  %s9 = scalar_select 0, %s8, %s6
  $region1: #{tpu_custom_call.1} parent=0
    #allocation3 [shape = 'u8[8192]{0}', space=vmem, size = 0x2000, scoped, tag = 'input window, operand 0, single buffered']
    #allocation4 [shape = 's32[1]{0}', space=sflag, size = 0x4, scoped, tag = 'scoped memory for tpu_custom_call.1']
    #allocation5 [shape = 's32[1]{0}', space=sflag, size = 0x4, scoped, tag = 'scoped memory for tpu_custom_call.1']
    #allocation6 [shape = 'u8[1024]{0}', space=vmem, size = 0x400, scoped, tag = 'output window, operand 0, single buffered']
    %10 = vsyncpa [#allocation4], 0
    %11 = vsyncpa [#allocation5], 0
    // Predicated region
    $region2: #{tpu_custom_call.1} parent=1 // pred_check
      _
    $region3: #{tpu_custom_call.1} parent=1 // pred_check_branch
      %13 = sbr.rel (0) target = $region5
    $region4: #{tpu_custom_call.1} parent=1 // pred_region
      %s15 = ssub.s32 256, 256
      %16 = vsyncadd [#allocation4], %s15
      %s17 = sshll.u32 [#allocation3], 4
      %s18 = int_to_ptr.vmem [resolvable:$true] %s17
      %23 = dma.hbm_to_vmem [thread:$0]  %s0, 256, %s18, [#allocation4], 128, 128, 8
    $region5: #{tpu_custom_call.1} parent=1 // pred_fallthru
      _
    // Predicated region
    $region6: #{tpu_custom_call.1} parent=1 // pred_check
      _
    $region7: #{tpu_custom_call.1} parent=1 // pred_check_branch
      %25 = sbr.rel (0) target = $region9
    $region8: #{tpu_custom_call.1} parent=1 // pred_region
      _
    $region9: #{tpu_custom_call.1} parent=1 // pred_fallthru
      _
    // Predicated region
    $region10: #{tpu_custom_call.1} parent=1 // pred_check
      _
    $region11: #{tpu_custom_call.1} parent=1 // pred_check_branch
      %27 = sbr.rel (0) target = $region13
    $region12: #{tpu_custom_call.1} parent=1 // pred_region
      _
    $region13: #{tpu_custom_call.1} parent=1 // pred_fallthru
      _
    // Predicated region
    $region14: #{tpu_custom_call.1} parent=1 // pred_check
      _
    $region15: #{tpu_custom_call.1} parent=1 // pred_check_branch
      %29 = sbr.rel (0) target = $region17
    $region16: #{tpu_custom_call.1} parent=1 // pred_region
      _
    $region17: #{tpu_custom_call.1} parent=1 // pred_fallthru
      _
    // Predicated region
    $region18: #{tpu_custom_call.1} parent=1 // pred_check
      _
    $region19: #{tpu_custom_call.1} parent=1 // pred_check_branch
      %31 = sbr.rel (0) target = $region21
    $region20: #{tpu_custom_call.1} parent=1 // pred_region
      _
    $region21: #{tpu_custom_call.1} parent=1 // pred_fallthru
      _
    // Predicated region
    $region22: #{tpu_custom_call.1} parent=1 // pred_check
      _
    $region23: #{tpu_custom_call.1} parent=1 // pred_check_branch
      %33 = sbr.rel (0) target = $region25
    $region24: #{tpu_custom_call.1} parent=1 // pred_region
      %34 = dma.done [#allocation4], 256
    $region25: #{tpu_custom_call.1} parent=1 // pred_fallthru
      _
    %p35 = scmp.eq.s32.totalorder 0, 0
    // Predicated region
    $region26: #{tpu_custom_call.1} parent=1 // pred_check
      %p36 = pneg %p35
    $region27: #{tpu_custom_call.1} parent=1 // pred_check_branch
      %38 = sbr.rel (%p36) target = $region29
    $region28: #{tpu_custom_call.1} parent=1 // pred_region
      %vm39 = vcmask 25600
      %40 = vst.msk [vmem:[#allocation2] sm:$0x3] %vm39, 0.0
    $region29: #{tpu_custom_call.1} parent=1 // pred_fallthru
      _
    %v41 = vld [vmem:[#allocation3] sm:$0xff]
    %v42 = vld [vmem:[#allocation3 + $0x8] sm:$0xff]
    %v43 = vld [vmem:[%s1] sm:$0xf]
    %45 = vset.pattern.permute.xlu0 0
    %46 = vperm.xlu0 %45, %v43
    %v47 = vpop.permute.xlu0 %46
    %v49 = vunpack.c.l.s4 839922192
    %v50 = vunpack.c.0.s8 %v49
    %v51 = vlaneseq
    %v52 = vshrl.u32 %v51, 7
    %v53 = vsub.s32 %v50, %v52
    %v54 = vrot.slane %v47, %v53
    %v56 = vmul.f32 %v41, %v54
    %v57 = vmul.f32 %v42, %v54
    %v58 = vld [vmem:[%s2] sm:$0xf]
    %60 = vset.pattern.permute.xlu0 0
    %61 = vperm.xlu0 %60, %v58
    %v62 = vpop.permute.xlu0 %61
    %v64 = vunpack.c.l.s4 839922192
    %v65 = vunpack.c.0.s8 %v64
    %v66 = vlaneseq
    %v67 = vshrl.u32 %v66, 7
    %v68 = vsub.s32 %v65, %v67
    %v69 = vrot.slane %v62, %v68
    %v71 = vadd.f32 %v56, %v69
    %v72 = vadd.f32 %v57, %v69
    %v73 = vmax.f32 %v71, 0.0
    %v74 = vmax.f32 %v72, 0.0
    %v75 = vld [vmem:[#allocation2] sm:$0x3]
    %v78 = vcombine.high %v73, %v73
    %v79 = vcombine.high %v74, %v74
    %vm82 = vcmask 1043456
    %v83 = vsel %vm82, %v73, 0.0
    %v84 = vsel %vm82, %v78, 0.0
    %v85 = vadd.f32 %v83, %v84
    %86 = vadd.xlane.f32.xlu0 %v85
    %v87 = vpop.xlane.xlu0 %86
    %v88 = vsel %vm82, %v74, 0.0
    %v89 = vsel %vm82, %v79, 0.0
    %v90 = vadd.f32 %v88, %v89
    %91 = vadd.xlane.f32.xlu0 %v90
    %v92 = vpop.xlane.xlu0 %91
    %v95 = vlaneseq
    %v96 = vand.u32 %v95, 127
    %v97 = vlaneseq
    %v98 = vshrl.u32 %v97, 7
    %v99 = vsub.s32 %v96, %v98
    %v100 = vrot.slane %v87, %v99
    %v101 = vlaneseq
    %v102 = vshrl.u32 %v101, 7
    %v103 = vsub.s32 %v96, %v102
    %v104 = vrot.slane %v92, %v103
    %vm105 = vcmask 1041409
    %v106 = vsel %vm105, %v104, %v100
    %v108 = vadd.f32 %v75, %v106
    %vm109 = vcmask 25600
    %110 = vst.msk [vmem:[#allocation2] sm:$0x3] %vm109, %v108
    // Predicated region
    $region30: #{tpu_custom_call.1} parent=1 // pred_check
      %p111 = pneg %p35
    $region31: #{tpu_custom_call.1} parent=1 // pred_check_branch
      %113 = sbr.rel (%p111) target = $region33
    $region32: #{tpu_custom_call.1} parent=1 // pred_region
      %v114 = vld [vmem:[#allocation2] sm:$0x3]
      %v115 = vmul.f32 %v114, 0.00390625
      %v116 = vld [vmem:[%s3] sm:$0xf]
      %v117 = vld [vmem:[%s4] sm:$0x1]
      %v119 = vlaneseq
      %v120 = vshrl.u32 %v119, 7
      %v121 = vsub.s32 0, %v120
      %v122 = vrot.slane %v117, %v121
      %vm124 = vcmask 31744
      %v126 = vsel %vm124, %v115, 0
      %v129 = vsel %vm82, %v116, 0
      %131 = vmatprep.subr.mxu0 0.0
      %132 = vmatpush1.msra.mxu0 0.0
      %133 = vmatprep.subr.mxu0 0.0
      %134 = vmatpush1.msra.mxu0 0.0
      %135 = vmatprep.subr.mxu0 0.0
      %136 = vmatpush1.msra.mxu0 0.0
      %137 = vmatprep.subr.mxu0 0.0
      %138 = vmatpush1.msra.mxu0 0.0
      %139 = vmatprep.subr.mxu0 0.0
      %140 = vmatpush1.msra.mxu0 0.0
      %141 = vmatprep.subr.mxu0 0.0
      %142 = vmatpush1.msra.mxu0 0.0
      %143 = vmatprep.subr.mxu0 0.0
      %144 = vmatpush1.msra.mxu0 0.0
      %145 = vmatprep.subr.mxu0 0.0
      %146 = vmatpush1.msra.mxu0 0.0
      %147 = vmatprep.subr.mxu0 0.0
      %148 = vmatpush1.msra.mxu0 0.0
      %149 = vmatprep.subr.mxu0 0.0
      %150 = vmatpush1.msra.mxu0 0.0
      %151 = vmatprep.subr.mxu0 0.0
      %152 = vmatpush1.msra.mxu0 0.0
      %153 = vmatprep.subr.mxu0 0.0
      %154 = vmatpush1.msra.mxu0 0.0
      %155 = vmatprep.subr.mxu0 0.0
      %156 = vmatpush1.msra.mxu0 0.0
      %157 = vmatprep.subr.mxu0 0.0
      %158 = vmatpush1.msra.mxu0 0.0
      %159 = vmatprep.subr.mxu0 0.0
      %160 = vmatpush1.msra.mxu0 0.0
      %161 = vmatprep.subr.mxu0 0.0
      %162 = vmatpush1.msra.mxu0 %v129
      %163 = vmatprep.subr.mxu0 0.0
      %164 = vmatpush2.msra.mxu0 0.0
      %165 = vmatprep.subr.mxu0 0.0
      %166 = vmatpush2.msra.mxu0 0.0
      %167 = vmatprep.subr.mxu0 0.0
      %168 = vmatpush2.msra.mxu0 0.0
      %169 = vmatprep.subr.mxu0 0.0
      %170 = vmatpush2.msra.mxu0 0.0
      %171 = vmatprep.subr.mxu0 0.0
      %172 = vmatpush2.msra.mxu0 0.0
      %173 = vmatprep.subr.mxu0 0.0
      %174 = vmatpush2.msra.mxu0 0.0
      %175 = vmatprep.subr.mxu0 0.0
      %176 = vmatpush2.msra.mxu0 0.0
      %177 = vmatprep.subr.mxu0 0.0
      %178 = vmatpush2.msra.mxu0 0.0
      %179 = vmatprep.subr.mxu0 0.0
      %180 = vmatpush2.msra.mxu0 0.0
      %181 = vmatprep.subr.mxu0 0.0
      %182 = vmatpush2.msra.mxu0 0.0
      %183 = vmatprep.subr.mxu0 0.0
      %184 = vmatpush2.msra.mxu0 0.0
      %185 = vmatprep.subr.mxu0 0.0
      %186 = vmatpush2.msra.mxu0 0.0
      %187 = vmatprep.subr.mxu0 0.0
      %188 = vmatpush2.msra.mxu0 0.0
      %189 = vmatprep.subr.mxu0 0.0
      %190 = vmatpush2.msra.mxu0 0.0
      %191 = vmatprep.subr.mxu0 0.0
      %192 = vmatpush2.msra.mxu0 0.0
      %193 = vmatprep.subr.mxu0 0.0
      %194 = vmatpush2.msra.mxu0 0.0
      %195 = vmatprep.mubr.f32.mxu0 0.0
      %196 = vmatmul.mubr.f32.gmra.mxu0 %v126
      %v197 = vpop.f32.mrf.mxu0
      %v198 = vadd.f32 %v122, %v197
      %v199 = vpop.f32.mrf.mxu0
      %200 = vdwg.mxu0
      %vm201 = vcmask 74752
      %v202 = vsel %vm201, %v198, -inf
      %203 = vmax.xlane.f32.xlu0 %v202
      %v204 = vpop.xlane.xlu0 %203
      %v205 = vsub.f32 %v198, %v204
      %v206 = vmul.f32 %v205, 1.442695
      %v207 = vpow.pop %v206
      %v208 = vsel %vm201, %v207, 0.0
      %209 = vadd.xlane.f32.xlu0 %v208
      %v210 = vpop.xlane.xlu0 %209
      %v211 = vlog2.pop %v210
      %v212 = vmul.f32 %v211, 0.6931472
      %v213 = vsub.f32 %v205, %v212
      %214 = vst.msk [vmem:[#allocation6] sm:$0x3] %vm201, %v213
    $region33: #{tpu_custom_call.1} parent=1 // pred_fallthru
      _
    // Predicated region
    $region34: #{tpu_custom_call.1} parent=1 // pred_check
      _
    $region35: #{tpu_custom_call.1} parent=1 // pred_check_branch
      %216 = sbr.rel (0) target = $region37
    $region36: #{tpu_custom_call.1} parent=1 // pred_region
      %s218 = ssub.s32 32, 32
      %219 = vsyncadd [#allocation5], %s218
      %s221 = sshll.u32 [#allocation6], 4
      %s222 = int_to_ptr.vmem [resolvable:$true] %s221
      %224 = dma.vmem_to_hbm [thread:$0]  %s222, 32, %s5, [#allocation5]
    $region37: #{tpu_custom_call.1} parent=1 // pred_fallthru
      _
    // Predicated region
    $region38: #{tpu_custom_call.1} parent=1 // pred_check
      _
    $region39: #{tpu_custom_call.1} parent=1 // pred_check_branch
      %226 = sbr.rel (0) target = $region41
    $region40: #{tpu_custom_call.1} parent=1 // pred_region
      %227 = dma.done [#allocation5], 32
    $region41: #{tpu_custom_call.1} parent=1 // pred_fallthru
      _
    %228 = vsyncpa [#allocation4], 1
    %229 = vsyncpa [#allocation5], 1

</llo_original>
